<compile_context>
chip_gen: v5e
topology: v5e:2x2
jax: 0.10.0
libtpu: 0.0.40
codegen_flags: <defaults>
</compile_context>

<pallas_src>
import functools
import math

import jax
import jax.numpy as jnp
from jax import lax
from jax.experimental import pallas as pl
from jax.experimental.pallas import tpu as pltpu

D_MODEL = 32
VOCAB = 11
_TILE_ROWS = 1024  # packed rows per grid step (multiple of 8); 1024x128 f32 tile ~0.5 MiB


def _embed_kernel(ids_ref, lutw_ref, o_ref, *, pack, vocab):
    """One grid step.

    ids_ref : (T, pack) int32  -- token ids, pre-shifted by c*vocab for packed slot c
    lutw_ref: (pack*vocab, pack*D) f32 -- block-diagonal embedding table * sqrt(D)
    o_ref   : (T, pack*D) f32 -- row r = concat_c lut[ids[r, c]] * sqrt(D)
    """
    ids = ids_ref[...]                                     # (T, pack) int32
    t = o_ref.shape[0]
    pv = pack * vocab
    col = lax.broadcasted_iota(jnp.int32, (t, pv), 1)      # lane-axis iota
    hit = col == ids[:, 0:1]
    for c in range(1, pack):                               # static unroll, pack <= 4
        hit = jnp.logical_or(hit, col == ids[:, c:c + 1])
    onehot = hit.astype(jnp.float32)                       # single convert
    o_ref[...] = jnp.dot(onehot, lutw_ref[...],
                         preferred_element_type=jnp.float32).astype(o_ref.dtype)


@jax.jit
def embeddings_forward(tokens, lut):
    """tokens: (B, S) int32, lut: (V, D) f32  ->  (B, S, D) f32 == lut[tokens] * sqrt(D)."""
    B, S = tokens.shape
    V, D = lut.shape
    M = B * S
    scale = math.sqrt(D)

    # Lane-dense packing: P consecutive tokens share one 128-lane output row.
    if D < 128 and 128 % D == 0:
        P = 128 // D
    else:
        P = 1  # D is already >= a full lane group (or odd); rows are (M, D).

    # Packed-row count; pad so every grid step gets a full, 8-aligned tile.
    mp_raw = -(-M // P)
    if mp_raw <= _TILE_ROWS:
        T = mp_raw               # single block == full extent (no 8-alignment needed)
        MP = mp_raw
    else:
        T = _TILE_ROWS
        MP = -(-mp_raw // T) * T
    M_pad = MP * P

    tok = tokens.reshape(-1).astype(jnp.int32)
    if M_pad > M:
        tok = jnp.pad(tok, (0, M_pad - M))   # pad with id 0 (always in range)
    # Pre-shift ids so packed slot c indexes block c of the block-diagonal table.
    ids2d = tok.reshape(MP, P) + jnp.arange(P, dtype=jnp.int32)[None, :] * V

    # Block-diagonal (P*V, P*D) table with sqrt(D) folded in (tiny wrapper-side op).
    lut_scaled = (lut * scale).astype(lut.dtype)
    lut_w = jnp.kron(jnp.eye(P, dtype=lut.dtype), lut_scaled) if P > 1 else lut_scaled

    out = pl.pallas_call(
        functools.partial(_embed_kernel, pack=P, vocab=V),
        out_shape=jax.ShapeDtypeStruct((MP, P * D), lut.dtype),
        grid=(MP // T,),
        in_specs=[
            pl.BlockSpec((T, P), lambda i: (i, 0)),
            pl.BlockSpec((P * V, P * D), lambda i: (0, 0)),  # whole table, VMEM-resident
        ],
        out_specs=pl.BlockSpec((T, P * D), lambda i: (i, 0)),
        compiler_params=pltpu.CompilerParams(
            dimension_semantics=("parallel",)),
        cost_estimate=pl.CostEstimate(
            flops=2 * MP * (P * V) * (P * D),
            transcendentals=0,
            bytes_accessed=4 * (MP * P + (P * V) * (P * D) + MP * P * D)),
    )(ids2d, lut_w)

    # (MP, P*D) row-major is byte-identical to (M_pad, D); drop padding, restore (B, S, D).
    return out.reshape(M_pad, D)[:M].reshape(B, S, D)


if __name__ == "__main__":
    key = jax.random.PRNGKey(0)
    k_tok, k_lut, k_tok2 = jax.random.split(key, 3)

    lut = jax.random.normal(k_lut, (VOCAB, D_MODEL), jnp.float32) * 0.1

    # Small canonical shape (B=2, S=8).
    B, S = 2, 8
    tokens = jax.random.randint(k_tok, (B, S), 0, VOCAB, dtype=jnp.int32)
    out = jax.block_until_ready(embeddings_forward(tokens, lut))
    ref = jnp.take(lut, tokens, axis=0) * math.sqrt(D_MODEL)
    assert out.shape == (B, S, D_MODEL) and out.dtype == jnp.float32
    assert bool(jnp.all(jnp.isfinite(out)))
    assert bool(jnp.allclose(out, ref, atol=1e-5, rtol=1e-5))

    # Shape whose token count is NOT a multiple of 128/D — exercises the padding path
    # (previously this fell back to masked partial stores).
    B2, S2 = 3, 5
    tokens2 = jax.random.randint(k_tok2, (B2, S2), 0, VOCAB, dtype=jnp.int32)
    out2 = jax.block_until_ready(embeddings_forward(tokens2, lut))
    ref2 = jnp.take(lut, tokens2, axis=0) * math.sqrt(D_MODEL)
    assert out2.shape == (B2, S2, D_MODEL)
    assert bool(jnp.allclose(out2, ref2, atol=1e-5, rtol=1e-5))

    print("KERNEL_OK")
</pallas_src>

<mosaic_0001>
module attributes {stable_mosaic.version = 11 : i64} {
  func.func @_embed_kernel(%arg0: i32, %arg1: memref<4x4xi32, #tpu.memory_space<vmem>>, %arg2: memref<44x128xf32, #tpu.memory_space<vmem>>, %arg3: memref<4x128xf32, #tpu.memory_space<vmem>>) attributes {dimension_semantics = [#tpu.dimension_semantics<parallel>], iteration_bounds = array<i64: 1>, scalar_prefetch = 0 : i64, scratch_operands = 0 : i64, tpu.core_type = #tpu.core_type<tc>, window_params = [{transform_indices = @transform_0, window_bounds = array<i64: 4, 4>}, {pipeline_mode = #tpu.pipeline_mode<synchronous>, transform_indices = @transform_1, window_bounds = array<i64: 44, 128>}, {transform_indices = @transform_2, window_bounds = array<i64: 4, 128>}]} {
    %c0 = arith.constant 0 : index
    %c0_0 = arith.constant 0 : index
    %0 = vector.load %arg1[%c0, %c0_0] : memref<4x4xi32, #tpu.memory_space<vmem>>, vector<4x4xi32>
    %1 = tpu.iota {dimensions = array<i32: 1>} : vector<4x44xi32>
    %2 = vector.extract_strided_slice %0 {offsets = [0, 0], sizes = [4, 1], strides = [1, 1]} : vector<4x4xi32> to vector<4x1xi32>
    %3 = vector.broadcast %2 : vector<4x1xi32> to vector<4x44xi32>
    %4 = arith.cmpi eq, %1, %3 : vector<4x44xi32>
    %5 = vector.extract_strided_slice %0 {offsets = [0, 1], sizes = [4, 1], strides = [1, 1]} : vector<4x4xi32> to vector<4x1xi32>
    %6 = vector.broadcast %5 : vector<4x1xi32> to vector<4x44xi32>
    %7 = arith.cmpi eq, %1, %6 : vector<4x44xi32>
    %8 = arith.ori %4, %7 : vector<4x44xi1>
    %9 = vector.extract_strided_slice %0 {offsets = [0, 2], sizes = [4, 1], strides = [1, 1]} : vector<4x4xi32> to vector<4x1xi32>
    %10 = vector.broadcast %9 : vector<4x1xi32> to vector<4x44xi32>
    %11 = arith.cmpi eq, %1, %10 : vector<4x44xi32>
    %12 = arith.ori %8, %11 : vector<4x44xi1>
    %13 = vector.extract_strided_slice %0 {offsets = [0, 3], sizes = [4, 1], strides = [1, 1]} : vector<4x4xi32> to vector<4x1xi32>
    %14 = vector.broadcast %13 : vector<4x1xi32> to vector<4x44xi32>
    %15 = arith.cmpi eq, %1, %14 : vector<4x44xi32>
    %16 = arith.ori %12, %15 : vector<4x44xi1>
    %17 = arith.extui %16 : vector<4x44xi1> to vector<4x44xi32>
    %18 = arith.sitofp %17 : vector<4x44xi32> to vector<4x44xf32>
    %c0_1 = arith.constant 0 : index
    %c0_2 = arith.constant 0 : index
    %19 = vector.load %arg2[%c0_1, %c0_2] : memref<44x128xf32, #tpu.memory_space<vmem>>, vector<44x128xf32>
    %cst = arith.constant dense<0.000000e+00> : vector<4x128xf32>
    %20 = tpu.matmul %18, %19, %cst {dimension_numbers = #tpu.dot_dimension_numbers<[1], [0], [0], [1], [0, 0, 1, 1], [], []>} : vector<4x44xf32>, vector<44x128xf32>, vector<4x128xf32> -> vector<4x128xf32>
    %c0_3 = arith.constant 0 : index
    %c0_4 = arith.constant 0 : index
    %21 = vector.load %arg3[%c0_3, %c0_4] : memref<4x128xf32, #tpu.memory_space<vmem>>, vector<4x128xf32>
    tpu.vector_store %arg3[%c0_3, %c0_4], %20 {strides = array<i32>} : memref<4x128xf32, #tpu.memory_space<vmem>>, vector<4x128xf32>,
    return
  }
  func.func @transform_0(%arg0: i32) -> (i32, i32) {
    %c0_i32 = arith.constant 0 : i32
    %c0_i32_0 = arith.constant 0 : i32
    return %arg0, %c0_i32 : i32, i32
  }
  func.func @transform_1(%arg0: i32) -> (i32, i32) {
    %c0_i32 = arith.constant 0 : i32
    %c0_i32_0 = arith.constant 0 : i32
    %c0_i32_1 = arith.constant 0 : i32
    return %c0_i32, %c0_i32_0 : i32, i32
  }
  func.func @transform_2(%arg0: i32) -> (i32, i32) {
    %c0_i32 = arith.constant 0 : i32
    %c0_i32_0 = arith.constant 0 : i32
    return %arg0, %c0_i32 : i32, i32
  }
}

</mosaic_0001>

<llo_original>
// kernel: embeddings_forward.1
$region0: #{embeddings_forward.1}
  #allocation0 [shape = 'u32[]', space=smem, size = 0x4, offset = 0x4, fixed_abs, tag = 'smem constant byte address 0x4 - core index']
  #allocation1 [shape = 'u32[72,128]{1,0:T(1,128)}', space=vmem, size = 0x9000, scoped, tag = 'internal scratch']
  %s0 = inlined_call_operand.vmem [shape: s32[4,4], index: 0, kind: input, shape index: {}]
  %s1 = inlined_call_operand.vmem [shape: f32[44,128], index: 1, kind: input, shape index: {}]
  %s2 = inlined_call_operand.vmem [shape: f32[4,128], index: 2, kind: output, shape index: {}]
  %s3 = sld [smem:[#allocation0]]
  $region18: #{embeddings_forward.1} parent=0
    _
  %s5 = ssub.s32 1, %s3
  %s6 = scalar_select 0, %s5, %s3
  // Predicated region
  $region2: #{embeddings_forward.1} parent=0 // pred_check
    _
  $region3: #{embeddings_forward.1} parent=0 // pred_check_branch
    %8 = sbr.rel (0) target = $region5
  $region4: #{embeddings_forward.1} parent=0 // pred_region
    _
  $region5: #{embeddings_forward.1} parent=0 // pred_fallthru
    _
  // Predicated region
  $region6: #{embeddings_forward.1} parent=0 // pred_check
    _
  $region7: #{embeddings_forward.1} parent=0 // pred_check_branch
    %10 = sbr.rel (0) target = $region9
  $region8: #{embeddings_forward.1} parent=0 // pred_region
    _
  $region9: #{embeddings_forward.1} parent=0 // pred_fallthru
    _
  %v11 = vld [vmem:[%s0] sm:$0xf]
  %v12 = vlaneseq
  %v13 = vand.u32 %v12, 127
  %14 = vset.pattern.permute.xlu0 0
  %15 = vperm.xlu0 %14, %v11
  %v16 = vpop.permute.xlu0 %15
  %vm17 = vcmp.eq.s32.totalorder %v13, %v16
  %18 = vset.pattern.permute.xlu0 1
  %19 = vperm.xlu0 %18, %v11
  %v20 = vpop.permute.xlu0 %19
  %vm21 = vcmp.eq.s32.totalorder %v13, %v20
  %vm22 = vmor %vm17, %vm21
  %23 = vset.pattern.permute.xlu0 2
  %24 = vperm.xlu0 %23, %v11
  %v25 = vpop.permute.xlu0 %24
  %vm26 = vcmp.eq.s32.totalorder %v13, %v25
  %vm27 = vmor %vm22, %vm26
  %28 = vset.pattern.permute.xlu0 3
  %29 = vperm.xlu0 %28, %v11
  %v30 = vpop.permute.xlu0 %29
  %vm31 = vcmp.eq.s32.totalorder %v13, %v30
  %vm32 = vmor %vm27, %vm31
  %v33 = vsel %vm32, 1, 0
  %v34 = vcvt.s32.f32 %v33
  %v35 = vld [vmem:[%s1] sm:$0xff]
  %v36 = vld [vmem:[%s1 + $0x8] sm:$0xff]
  %v37 = vld [vmem:[%s1 + $0x10] sm:$0xff]
  %v38 = vld [vmem:[%s1 + $0x18] sm:$0xff]
  %v39 = vld [vmem:[%s1 + $0x20] sm:$0xff]
  %v40 = vld [vmem:[%s1 + $0x28] sm:$0xf]
  %vm41 = vcmask 359424
  %v43 = vsel %vm41, %v34, 0
  %vm45 = vcmask 1043456
  %v47 = vsel %vm45, %v40, 0
  %49 = vmatpush.msra.mxu0 0.0
  %50 = vmatpush.msra.mxu0 0.0
  %51 = vmatpush.msra.mxu0 0.0
  %52 = vmatpush.msra.mxu0 0.0
  %53 = vmatpush.msra.mxu0 0.0
  %54 = vmatpush.msra.mxu0 0.0
  %55 = vmatpush.msra.mxu0 0.0
  %56 = vmatpush.msra.mxu0 0.0
  %57 = vmatpush.msra.mxu0 0.0
  %58 = vmatpush.msra.mxu0 0.0
  %59 = vmatpush.msra.mxu0 %v47
  %60 = vmatpush.msra.mxu0 %v39
  %61 = vmatpush.msra.mxu0 %v38
  %62 = vmatpush.msra.mxu0 %v37
  %63 = vmatpush.msra.mxu0 %v36
  %64 = vmatpush.msra.mxu0 %v35
  %65 = vmatmul.f32.gmra.mxu0 %v43
  %v66 = vpop.f32.mrf.mxu0
  %v67 = vadd.f32 0.0, %v66
  %68 = vdwg.mxu0
  %69 = vst [vmem:[%s2] sm:$0xf] %v67
  // Predicated region
  $region10: #{embeddings_forward.1} parent=0 // pred_check
    _
  $region11: #{embeddings_forward.1} parent=0 // pred_check_branch
    %71 = sbr.rel (0) target = $region13
  $region12: #{embeddings_forward.1} parent=0 // pred_region
    _
  $region13: #{embeddings_forward.1} parent=0 // pred_fallthru
    _
  // Predicated region
  $region14: #{embeddings_forward.1} parent=0 // pred_check
    _
  $region15: #{embeddings_forward.1} parent=0 // pred_check_branch
    %73 = sbr.rel (0) target = $region17
  $region16: #{embeddings_forward.1} parent=0 // pred_region
    _
  $region17: #{embeddings_forward.1} parent=0 // pred_fallthru
    _

</llo_original>
